<compile_context>
chip_gen: v6e
topology: v6e:2x2x1
jax: 0.10.0
libtpu: 0.0.40
codegen_flags: <defaults>
</compile_context>

<pallas_src>
import jax
import jax.numpy as jnp
from jax import lax
from jax.experimental import pallas as pl
from jax.experimental.pallas import tpu as pltpu


# --------------------------------------------------------------------------- #
# Helpers
# --------------------------------------------------------------------------- #
def _vmem_capacity_bytes(default=64 << 20):
    """Physical VMEM of the local chip; conservative default if unknown."""
    try:
        return int(pltpu.get_tpu_info().vmem_capacity_bytes)
    except Exception:
        return default


def _round_up(n, m):
    return ((n + m - 1) // m) * m


def _divisors(n):
    ds = set()
    d = 1
    while d * d <= n:
        if n % d == 0:
            ds.add(d)
            ds.add(n // d)
        d += 1
    return sorted(ds)


def _shift_fill_zero(x, shift, axis):
    """Shift x by `shift` along `axis` (toward higher index if positive),
    filling the vacated positions with zeros.  `shift` is a static Python int.
    Produces a single full-block value -> one aligned store at the call site."""
    n = x.shape[axis]
    k = abs(int(shift))
    if k == 0:
        return x
    if k >= n:
        return jnp.zeros(x.shape, x.dtype)
    fill = list(x.shape)
    fill[axis] = k
    z = jnp.zeros(tuple(fill), x.dtype)
    if shift > 0:
        return jnp.concatenate([z, lax.slice_in_dim(x, 0, n - k, axis=axis)],
                               axis=axis)
    return jnp.concatenate([lax.slice_in_dim(x, k, n, axis=axis), z], axis=axis)


# --------------------------------------------------------------------------- #
# Kernels
# --------------------------------------------------------------------------- #
def _make_flat_kernel(r, W):
    """Lane-dense kernel on (N, C, H*W) blocks of shape (nb, tc, H*W).

    r = number of C blocks per shift group (g // tc).  `col_ref` holds the
    precomputed per-position column index (flat_pos % W), shape (1, H*W)."""

    def kernel(col_ref, x_ref, o_ref):
        j = pl.program_id(1)                     # C-block index
        x = x_ref[...]
        hw = x.shape[-1]
        col = col_ref[...].reshape(1, 1, hw)     # broadcasts over (nb, tc, hw)

        @pl.when(j < r)                          # +1 along H, zero row 0
        def _():
            o_ref[...] = _shift_fill_zero(x, W, axis=2)

        @pl.when((j >= r) & (j < 2 * r))         # -1 along W, zero col W-1
        def _():
            o_ref[...] = jnp.where(col != W - 1,
                                   _shift_fill_zero(x, -1, axis=2), 0)

        @pl.when((j >= 2 * r) & (j < 3 * r))     # -1 along H, zero row H-1
        def _():
            o_ref[...] = _shift_fill_zero(x, -W, axis=2)

        @pl.when((j >= 3 * r) & (j < 4 * r))     # +1 along W, zero col 0
        def _():
            o_ref[...] = jnp.where(col != 0,
                                   _shift_fill_zero(x, 1, axis=2), 0)

        @pl.when(j >= 4 * r)                     # identity channels
        def _():
            o_ref[...] = x

    return kernel


def _make_nchw_kernel(r):
    """Fallback NCHW kernel on blocks (nb, tc, H, W) with full H, W."""

    def kernel(x_ref, o_ref):
        j = pl.program_id(1)                     # C-block index
        x = x_ref[...]

        @pl.when(j < r)                          # +1 along H, zero row 0
        def _():
            o_ref[...] = _shift_fill_zero(x, 1, axis=2)

        @pl.when((j >= r) & (j < 2 * r))         # -1 along W, zero col W-1
        def _():
            o_ref[...] = _shift_fill_zero(x, -1, axis=3)

        @pl.when((j >= 2 * r) & (j < 3 * r))     # -1 along H, zero row H-1
        def _():
            o_ref[...] = _shift_fill_zero(x, -1, axis=2)

        @pl.when((j >= 3 * r) & (j < 4 * r))     # +1 along W, zero col 0
        def _():
            o_ref[...] = _shift_fill_zero(x, 1, axis=3)

        @pl.when(j >= 4 * r)                     # identity channels
        def _():
            o_ref[...] = x

    return kernel


# --------------------------------------------------------------------------- #
# Wrapper
# --------------------------------------------------------------------------- #
def shift_4c(x):
    N, C, H, W = x.shape
    g = C // 5
    if g == 0:
        raise ValueError("Channel number too small to implement shift")

    dt = x.dtype
    itemsize = jnp.dtype(dt).itemsize
    HW = H * W
    sub = 8 * max(1, 4 // itemsize)              # sublane tile rows per dtype

    capacity = _vmem_capacity_bytes()
    # ~capacity/8 per block, capped at 12 MiB so 4x double-buffered blocks stay
    # under v7x's 64 MiB per-TensorCore VMEM even if `capacity` is per-chip.
    budget = max(2 << 20, min(capacity // 8, 12 << 20))

    flat_row_bytes = _round_up(HW, 128) * itemsize   # one channel, lane-padded
    use_flat = (g % 8 == 0) and (_round_up(8, sub) * flat_row_bytes <= budget)

    if use_flat:
        # Largest tc = 8*m with m | (g//8) whose padded block fits the budget.
        m = max(d for d in _divisors(g // 8)
                if _round_up(8 * d, sub) * flat_row_bytes <= budget)
        tc = 8 * m
        per_batch = _round_up(tc, sub) * flat_row_bytes
        nb = int(max(1, min(N, budget // per_batch)))
        r = g // tc
        block = (nb, tc, HW)
        block_bytes = nb * per_batch

        xf = x.reshape(N, C, HW)
        col = (jnp.arange(HW, dtype=jnp.int32) % W).reshape(1, HW)
        args = (col, xf)
        kernel = _make_flat_kernel(r, W)
        in_specs = [pl.BlockSpec((1, HW), lambda n, j: (0, 0)),
                    pl.BlockSpec(block, lambda n, j: (n, j, 0))]
        out_specs = pl.BlockSpec(block, lambda n, j: (n, j, 0))
        out_shape = jax.ShapeDtypeStruct((N, C, HW), dt)
    else:
        chan_bytes = _round_up(H, sub) * _round_up(W, 128) * itemsize
        cands = [d for d in _divisors(g) if d * chan_bytes <= budget]
        tc = max(cands) if cands else 1
        per_batch = tc * chan_bytes
        nb = int(max(1, min(N, budget // max(per_batch, 1))))
        r = g // tc
        block = (nb, tc, H, W)
        block_bytes = nb * per_batch

        args = (x,)
        kernel = _make_nchw_kernel(r)
        in_specs = [pl.BlockSpec(block, lambda n, j: (n, j, 0, 0))]
        out_specs = pl.BlockSpec(block, lambda n, j: (n, j, 0, 0))
        out_shape = jax.ShapeDtypeStruct((N, C, H, W), dt)

    # C axis always has >= 5 blocks (one per group at minimum) -> both v7x
    # TensorCores get parallel work even when the batch axis collapses to 1.
    grid = (pl.cdiv(N, nb), pl.cdiv(C, tc))

    # in + out blocks, double-buffered, plus headroom (mask input, constants).
    need = 4 * block_bytes + (2 << 20)
    vmem_limit = int(min(max(need, 32 << 20), 96 << 20))

    out = pl.pallas_call(
        kernel,
        out_shape=out_shape,
        grid_spec=pltpu.PrefetchScalarGridSpec(
            num_scalar_prefetch=0,
            grid=grid,
            in_specs=in_specs,
            out_specs=out_specs,
        ),
        compiler_params=pltpu.CompilerParams(
            dimension_semantics=("parallel", "parallel"),
            vmem_limit_bytes=vmem_limit,
        ),
    )(*args)
    return out.reshape(N, C, H, W)


# --------------------------------------------------------------------------- #
# Plain-JAX reference (matches the PyTorch module exactly)
# --------------------------------------------------------------------------- #
def shift_4c_ref(x):
    N, C, H, W = x.shape
    g = C // 5
    x0, x1, x2, x3, x4 = (x[:, 0:g], x[:, g:2 * g], x[:, 2 * g:3 * g],
                          x[:, 3 * g:4 * g], x[:, 4 * g:])
    parts = []
    r = jnp.roll(x0, 1, axis=2);  r = r.at[:, :, 0, :].set(0);      parts.append(r)
    r = jnp.roll(x1, -1, axis=3); r = r.at[:, :, :, W - 1].set(0);  parts.append(r)
    r = jnp.roll(x2, -1, axis=2); r = r.at[:, :, H - 1, :].set(0);  parts.append(r)
    r = jnp.roll(x3, 1, axis=3);  r = r.at[:, :, :, 0].set(0);      parts.append(r)
    parts.append(x4)
    return jnp.concatenate(parts, axis=1)


if __name__ == "__main__":
    k0, k1, k2, k3 = jax.random.split(jax.random.PRNGKey(0), 4)

    # 1) NCHW fallback path (g=2, not a multiple of 8).
    x = jax.random.normal(k0, (2, 12, 16, 16), dtype=jnp.float32)
    out = jax.block_until_ready(shift_4c(x))
    assert out.shape == x.shape and out.dtype == x.dtype
    assert jnp.array_equal(out, shift_4c_ref(x)), "mismatch (2,12,16,16) f32"

    # 2) Lane-dense flat path (g=8 -> tc=8, flattened H*W=256 on lanes).
    x = jax.random.normal(k1, (2, 40, 16, 16), dtype=jnp.float32)
    out = jax.block_until_ready(shift_4c(x))
    assert jnp.array_equal(out, shift_4c_ref(x)), "mismatch (2,40,16,16) f32"

    # 3) Ragged identity tail (C=13): exercises partial trailing C block.
    x = jax.random.normal(k2, (2, 13, 16, 16), dtype=jnp.float32)
    out = jax.block_until_ready(shift_4c(x))
    assert jnp.array_equal(out, shift_4c_ref(x)), "mismatch (2,13,16,16) f32"

    # 4) bf16 flat path with a sublane-tile-aligned C tile (g=16 -> tc=16).
    x = jax.random.normal(k3, (2, 80, 8, 16), dtype=jnp.bfloat16)
    out = jax.block_until_ready(shift_4c(x))
    assert out.dtype == x.dtype
    assert jnp.array_equal(out, shift_4c_ref(x)), "mismatch (2,80,8,16) bf16"

    print("KERNEL_OK")
</pallas_src>

<mosaic_0001>
module attributes {stable_mosaic.version = 11 : i64} {
  func.func @kernel(%arg0: i32, %arg1: i32, %arg2: memref<2x2x16x16xf32, #tpu.memory_space<vmem>>, %arg3: memref<2x2x16x16xf32, #tpu.memory_space<vmem>>) attributes {dimension_semantics = [#tpu.dimension_semantics<parallel>, #tpu.dimension_semantics<parallel>], iteration_bounds = array<i64: 1, 6>, scalar_prefetch = 0 : i64, scratch_operands = 0 : i64, tpu.core_type = #tpu.core_type<tc>, window_params = [{transform_indices = @transform_0, window_bounds = array<i64: 2, 2, 16, 16>}, {transform_indices = @transform_1, window_bounds = array<i64: 2, 2, 16, 16>}]} {
    %c0 = arith.constant 0 : index
    %c0_0 = arith.constant 0 : index
    %c0_1 = arith.constant 0 : index
    %c0_2 = arith.constant 0 : index
    %0 = vector.load %arg2[%c0, %c0_0, %c0_1, %c0_2] : memref<2x2x16x16xf32, #tpu.memory_space<vmem>>, vector<2x2x16x16xf32>
    %c1_i32 = arith.constant 1 : i32
    %1 = arith.cmpi slt, %arg1, %c1_i32 : i32
    %2 = arith.extui %1 : i1 to i32
    %c0_i32 = arith.constant 0 : i32
    %3 = arith.cmpi ne, %2, %c0_i32 : i32
    scf.if %3 {
      %cst = arith.constant 0.000000e+00 : f32
      %22 = vector.broadcast %cst : f32 to vector<2x2x1x16xf32>
      %23 = vector.extract_strided_slice %0 {offsets = [0, 0, 0, 0], sizes = [2, 2, 15, 16], strides = [1, 1, 1, 1]} : vector<2x2x16x16xf32> to vector<2x2x15x16xf32>
      %24 = tpu.concatenate %22, %23 in 2 : vector<2x2x1x16xf32>, vector<2x2x15x16xf32> -> vector<2x2x16x16xf32>
      %c0_11 = arith.constant 0 : index
      %c0_12 = arith.constant 0 : index
      %c0_13 = arith.constant 0 : index
      %c0_14 = arith.constant 0 : index
      %25 = vector.load %arg3[%c0_11, %c0_12, %c0_13, %c0_14] : memref<2x2x16x16xf32, #tpu.memory_space<vmem>>, vector<2x2x16x16xf32>
      tpu.vector_store %arg3[%c0_11, %c0_12, %c0_13, %c0_14], %24 {strides = array<i32>} : memref<2x2x16x16xf32, #tpu.memory_space<vmem>>, vector<2x2x16x16xf32>,
    } else {
    }
    %c1_i32_3 = arith.constant 1 : i32
    %4 = arith.cmpi sge, %arg1, %c1_i32_3 : i32
    %c2_i32 = arith.constant 2 : i32
    %5 = arith.cmpi slt, %arg1, %c2_i32 : i32
    %6 = arith.andi %4, %5 : i1
    %7 = arith.extui %6 : i1 to i32
    %c0_i32_4 = arith.constant 0 : i32
    %8 = arith.cmpi ne, %7, %c0_i32_4 : i32
    scf.if %8 {
      %cst = arith.constant 0.000000e+00 : f32
      %22 = vector.broadcast %cst : f32 to vector<2x2x16x1xf32>
      %23 = vector.extract_strided_slice %0 {offsets = [0, 0, 0, 1], sizes = [2, 2, 16, 15], strides = [1, 1, 1, 1]} : vector<2x2x16x16xf32> to vector<2x2x16x15xf32>
      %24 = tpu.concatenate %23, %22 in 3 : vector<2x2x16x15xf32>, vector<2x2x16x1xf32> -> vector<2x2x16x16xf32>
      %c0_11 = arith.constant 0 : index
      %c0_12 = arith.constant 0 : index
      %c0_13 = arith.constant 0 : index
      %c0_14 = arith.constant 0 : index
      %25 = vector.load %arg3[%c0_11, %c0_12, %c0_13, %c0_14] : memref<2x2x16x16xf32, #tpu.memory_space<vmem>>, vector<2x2x16x16xf32>
      tpu.vector_store %arg3[%c0_11, %c0_12, %c0_13, %c0_14], %24 {strides = array<i32>} : memref<2x2x16x16xf32, #tpu.memory_space<vmem>>, vector<2x2x16x16xf32>,
    } else {
    }
    %c2_i32_5 = arith.constant 2 : i32
    %9 = arith.cmpi sge, %arg1, %c2_i32_5 : i32
    %c3_i32 = arith.constant 3 : i32
    %10 = arith.cmpi slt, %arg1, %c3_i32 : i32
    %11 = arith.andi %9, %10 : i1
    %12 = arith.extui %11 : i1 to i32
    %c0_i32_6 = arith.constant 0 : i32
    %13 = arith.cmpi ne, %12, %c0_i32_6 : i32
    scf.if %13 {
      %cst = arith.constant 0.000000e+00 : f32
      %22 = vector.broadcast %cst : f32 to vector<2x2x1x16xf32>
      %23 = vector.extract_strided_slice %0 {offsets = [0, 0, 1, 0], sizes = [2, 2, 15, 16], strides = [1, 1, 1, 1]} : vector<2x2x16x16xf32> to vector<2x2x15x16xf32>
      %24 = tpu.concatenate %23, %22 in 2 : vector<2x2x15x16xf32>, vector<2x2x1x16xf32> -> vector<2x2x16x16xf32>
      %c0_11 = arith.constant 0 : index
      %c0_12 = arith.constant 0 : index
      %c0_13 = arith.constant 0 : index
      %c0_14 = arith.constant 0 : index
      %25 = vector.load %arg3[%c0_11, %c0_12, %c0_13, %c0_14] : memref<2x2x16x16xf32, #tpu.memory_space<vmem>>, vector<2x2x16x16xf32>
      tpu.vector_store %arg3[%c0_11, %c0_12, %c0_13, %c0_14], %24 {strides = array<i32>} : memref<2x2x16x16xf32, #tpu.memory_space<vmem>>, vector<2x2x16x16xf32>,
    } else {
    }
    %c3_i32_7 = arith.constant 3 : i32
    %14 = arith.cmpi sge, %arg1, %c3_i32_7 : i32
    %c4_i32 = arith.constant 4 : i32
    %15 = arith.cmpi slt, %arg1, %c4_i32 : i32
    %16 = arith.andi %14, %15 : i1
    %17 = arith.extui %16 : i1 to i32
    %c0_i32_8 = arith.constant 0 : i32
    %18 = arith.cmpi ne, %17, %c0_i32_8 : i32
    scf.if %18 {
      %cst = arith.constant 0.000000e+00 : f32
      %22 = vector.broadcast %cst : f32 to vector<2x2x16x1xf32>
      %23 = vector.extract_strided_slice %0 {offsets = [0, 0, 0, 0], sizes = [2, 2, 16, 15], strides = [1, 1, 1, 1]} : vector<2x2x16x16xf32> to vector<2x2x16x15xf32>
      %24 = tpu.concatenate %22, %23 in 3 : vector<2x2x16x1xf32>, vector<2x2x16x15xf32> -> vector<2x2x16x16xf32>
      %c0_11 = arith.constant 0 : index
      %c0_12 = arith.constant 0 : index
      %c0_13 = arith.constant 0 : index
      %c0_14 = arith.constant 0 : index
      %25 = vector.load %arg3[%c0_11, %c0_12, %c0_13, %c0_14] : memref<2x2x16x16xf32, #tpu.memory_space<vmem>>, vector<2x2x16x16xf32>
      tpu.vector_store %arg3[%c0_11, %c0_12, %c0_13, %c0_14], %24 {strides = array<i32>} : memref<2x2x16x16xf32, #tpu.memory_space<vmem>>, vector<2x2x16x16xf32>,
    } else {
    }
    %c4_i32_9 = arith.constant 4 : i32
    %19 = arith.cmpi sge, %arg1, %c4_i32_9 : i32
    %20 = arith.extui %19 : i1 to i32
    %c0_i32_10 = arith.constant 0 : i32
    %21 = arith.cmpi ne, %20, %c0_i32_10 : i32
    scf.if %21 {
      %c0_11 = arith.constant 0 : index
      %c0_12 = arith.constant 0 : index
      %c0_13 = arith.constant 0 : index
      %c0_14 = arith.constant 0 : index
      %22 = vector.load %arg3[%c0_11, %c0_12, %c0_13, %c0_14] : memref<2x2x16x16xf32, #tpu.memory_space<vmem>>, vector<2x2x16x16xf32>
      tpu.vector_store %arg3[%c0_11, %c0_12, %c0_13, %c0_14], %0 {strides = array<i32>} : memref<2x2x16x16xf32, #tpu.memory_space<vmem>>, vector<2x2x16x16xf32>,
    } else {
    }
    return
  }
  func.func @transform_0(%arg0: i32, %arg1: i32) -> (i32, i32, i32, i32) {
    %c0_i32 = arith.constant 0 : i32
    %c0_i32_0 = arith.constant 0 : i32
    %c0_i32_1 = arith.constant 0 : i32
    return %arg0, %arg1, %c0_i32, %c0_i32_0 : i32, i32, i32, i32
  }
  func.func @transform_1(%arg0: i32, %arg1: i32) -> (i32, i32, i32, i32) {
    %c0_i32 = arith.constant 0 : i32
    %c0_i32_0 = arith.constant 0 : i32
    %c0_i32_1 = arith.constant 0 : i32
    return %arg0, %arg1, %c0_i32, %c0_i32_0 : i32, i32, i32, i32
  }
}

</mosaic_0001>

<llo_original>
// kernel: tpu_custom_call.1
$region0: #{tpu_custom_call.1}
  #allocation0 [shape = 'u32[]', space=smem, size = 0x4, offset = 0x4, fixed_abs, tag = 'smem constant byte address 0x4 - core index']
  #allocation1 [shape = 'u32[144,128]{1,0:T(1,128)}', space=vmem, size = 0x12000, scoped, tag = 'internal scratch']
  #allocation6 [shape = 's32[]', space=sflag, size = 0x4, offset = 0, fixed_abs, tag = 'sflag constant byte address 0x0 - dummy sync flag']
  #allocation8 [shape = 's32[]', space=sflag, size = 0x4, offset = 0, fixed_abs, tag = 'sflag constant byte address 0x0 - dummy sync flag']
  %s0 = inlined_call_operand.hbm [shape: f32[2,12,16,16], index: 0, kind: input, shape index: {}]
  %s1 = inlined_call_operand.hbm [shape: f32[2,12,16,16], index: 1, kind: output, shape index: {}]
  %s2 = sld [smem:[#allocation0]]
  $region61: #{tpu_custom_call.1} parent=0
    _
  %s4 = ssub.s32 1, %s2
  %s5 = scalar_select 0, %s4, %s2
  $region1: #{tpu_custom_call.1} parent=0
    #allocation2 [shape = 'u8[65536]{0}', space=vmem, size = 0x10000, scoped, tag = 'input window, operand 0']
    #allocation3 [shape = 's32[2]{0}', space=sflag, size = 0x8, scoped, tag = 'scoped memory for tpu_custom_call.1']
    #allocation4 [shape = 's32[2]{0}', space=sflag, size = 0x8, scoped, tag = 'scoped memory for tpu_custom_call.1']
    #allocation5 [shape = 'u8[65536]{0}', space=vmem, size = 0x10000, scoped, tag = 'output window, operand 0']
    %6 = vsyncpa [#allocation3], 0
    %s7 = scalar_lea.sflag [#allocation3], 1
    %8 = vsyncpa %s7, 0
    %9 = vsyncpa [#allocation4], 0
    %s10 = scalar_lea.sflag [#allocation4], 1
    %11 = vsyncpa %s10, 0
    loop: start=0, step=1, limit=8
    $region2: #{tpu_custom_call.1} parent=1 // loop_pre_header
      _
    $region3: #{tpu_custom_call.1} parent=1 // loop_header
      %s13 = sphi 0, %s17
      %p14 = scmp.ge.s32.totalorder %s13, 8
      %s20 = sphi 0, %s32
      %s21 = sphi 0, %s28
      %s22 = sphi 0, %s20
      %s23 = sphi 0, %s21
      %s24 = sphi 0, %s22
      %s25 = sphi 0, %s23
      %s37 = sphi 0, %s39
      %s40 = sphi 0, %s37
      %s41 = sphi 0, %s40
      %s57 = sphi 0, %s41
      %s65 = sphi 0, %s67
      %s68 = sphi 0, %s65
      %s69 = sphi 0, %s68
      %s85 = sphi 0, %s69
    $region4: #{tpu_custom_call.1} parent=1 // loop_header_branch
      %16 = sbr.rel (%p14) target = $region8
    $region5: #{tpu_custom_call.1} parent=1 // loop_body
      %s18 = ssub.s32 %s13, 1
      %s19 = ssub.s32 %s13, 2
      %s26 = sadd.s32 1, %s21
      %p27 = scmp.ge.s32.totalorder %s26, 6
      %s28 = scalar_select %p27, 0, %s26
      %s29 = sadd.s32 1, %s20
      %s30 = scalar_select %p27, %s29, %s20
      %p31 = scmp.ge.s32.totalorder %s30, 1
      %s32 = scalar_select %p31, 0, %s30
      %s33 = ssub.s32 %s20, %s32
      %s34 = ssub.s32 %s21, %s28
      %s35 = sor.u32 %s33, %s34
      %p36 = scmp.eq.s32.totalorder %s35, 0
      %s38 = sadd.s32 %s37, 1
      %s39 = scalar_select %p36, %s37, %s38
      %p42 = pneg %p36
      %p43 = scmp.eq.s32.totalorder %s13, 5
      %p44 = por %p42, %p43
      %p45 = scmp.ne.s32.totalorder %s37, %s40
      %p46 = scmp.eq.s32.totalorder %s13, 0
      %p47 = por %p45, %p46
      %p48 = scmp.ne.s32.totalorder %s37, %s40
      %p49 = scmp.eq.s32.totalorder %s18, 5
      %p50 = por %p48, %p49
      %p51 = scmp.ne.s32.totalorder %s40, %s41
      %p52 = scmp.eq.s32.totalorder %s18, 0
      %p53 = por %p51, %p52
      %p54 = scmp.ne.s32.totalorder %s40, %s41
      %p55 = scmp.eq.s32.totalorder %s19, 5
      %p56 = por %p54, %p55
      %p58 = scmp.ne.s32.totalorder %s41, %s57
      %p59 = scmp.eq.s32.totalorder %s19, 0
      %p60 = por %p58, %p59
      %s61 = ssub.s32 %s20, %s32
      %s62 = ssub.s32 %s21, %s28
      %s63 = sor.u32 %s61, %s62
      %p64 = scmp.eq.s32.totalorder %s63, 0
      %s66 = sadd.s32 %s65, 1
      %s67 = scalar_select %p64, %s65, %s66
      %p70 = pneg %p64
      %p71 = scmp.eq.s32.totalorder %s13, 5
      %p72 = por %p70, %p71
      %p73 = scmp.ne.s32.totalorder %s65, %s68
      %p74 = scmp.eq.s32.totalorder %s13, 0
      %p75 = por %p73, %p74
      %p76 = scmp.ne.s32.totalorder %s65, %s68
      %p77 = scmp.eq.s32.totalorder %s18, 5
      %p78 = por %p76, %p77
      %p79 = scmp.ne.s32.totalorder %s68, %s69
      %p80 = scmp.eq.s32.totalorder %s18, 0
      %p81 = por %p79, %p80
      %p82 = scmp.ne.s32.totalorder %s68, %s69
      %p83 = scmp.eq.s32.totalorder %s19, 5
      %p84 = por %p82, %p83
      %p86 = scmp.ne.s32.totalorder %s69, %s85
      %p87 = scmp.eq.s32.totalorder %s19, 0
      %p88 = por %p86, %p87
      %p89 = scmp.le.s32.totalorder 1, %s13
      %p90 = scmp.lt.s32.totalorder %s13, 7
      %p91 = pnand %p89, %p90
      %p92 = pneg %p91
      // Predicated region
      $region9: #{tpu_custom_call.1} parent=5 // pred_check
        _
      $region10: #{tpu_custom_call.1} parent=5 // pred_check_branch
        %94 = sbr.rel (%p91) target = $region12
      $region11: #{tpu_custom_call.1} parent=5 // pred_region
        %s95 = ssub.s32 %s13, 1
      $region12: #{tpu_custom_call.1} parent=5 // pred_fallthru
        _
      %p96 = scmp.lt.s32.totalorder %s13, 6
      // Predicated region
      $region13: #{tpu_custom_call.1} parent=5 // pred_check
        %p97 = pneg %p96
      $region14: #{tpu_custom_call.1} parent=5 // pred_check_branch
        %99 = sbr.rel (%p97) target = $region16
      $region15: #{tpu_custom_call.1} parent=5 // pred_region
        // Predicated region
        $region17: #{tpu_custom_call.1} parent=15 // pred_check
          %p100 = pneg %p47
        $region18: #{tpu_custom_call.1} parent=15 // pred_check_branch
          %102 = sbr.rel (%p100) target = $region20
        $region19: #{tpu_custom_call.1} parent=15 // pred_region
          #allocation7 [shape = 'u32[6]{0}', space=smem, size = 0x18, scoped, tag = 'DMA stride descriptor']
          %s103 = sand.u32 %s37, 1
          %s104 = scalar_lea.sflag [#allocation3], %s103
          %s105 = sand.u32 %s37, 1
          %s106 = smul.addr %s105, 64
          %s107 = scalar_lea.vmem [#allocation2], %s106
          %s108 = smul.u32 2, %s20
          %s109 = smul.u32 2, %s21
          %s111 = ssub.s32 1024, 1024
          %112 = vsyncadd %s104, %s111
          %s113 = smul.addr %s109, 2
          %s114 = smul.addr %s108, 24
          %s115 = sadd.s32 %s113, %s114
          %s116 = smul.addr %s115, 128
          %s117 = scalar_lea.hbm %s0, %s116
          %s119 = sshll.u32 1, 14
          %s120 = sxor.u32 4294967295, %s119
          %s122 = sld [smem:[#allocation0]]
          %s123 = sadd.s32 2, %s122
          %s125 = sshll.u32 7, 26
          %s126 = sxor.u32 4294967295, %s125
          %s127 = sand.u32 0, %s126
          %s128 = sshll.u32 %s123, 26
          %s129 = sor.u32 %s127, %s128
          %s130 = sshll.u32 %s107, 4
          %s131 = int_to_ptr.vmem [resolvable:$true] %s130
          %137 = sst [smem:[#allocation7]] 3072
          %s138 = scalar_lea.smem [#allocation7], 1
          %139 = sst [smem:[%s138]] 512
          %s140 = scalar_lea.smem [#allocation7], 2
          %141 = sst [smem:[%s140]] 4
          %s142 = scalar_lea.smem [#allocation7], 3
          %143 = sst [smem:[%s142]] 128
          %s144 = scalar_lea.smem [#allocation7], 4
          %145 = sst [smem:[%s144]] 128
          %s146 = scalar_lea.smem [#allocation7], 5
          %147 = sst [smem:[%s146]] 8
          %149 = dma.general %s117, 1024, %s131, %s104, 131072, [#allocation7], %s129, 0
        $region20: #{tpu_custom_call.1} parent=15 // pred_fallthru
          _
      $region16: #{tpu_custom_call.1} parent=5 // pred_fallthru
        _
      %p150 = scmp.le.s32.totalorder 1, %s13
      %p151 = scmp.lt.s32.totalorder %s13, 7
      %p152 = pnand %p150, %p151
      %p153 = pneg %p152
      // Predicated region
      $region21: #{tpu_custom_call.1} parent=5 // pred_check
        _
      $region22: #{tpu_custom_call.1} parent=5 // pred_check_branch
        %155 = sbr.rel (%p152) target = $region24
      $region23: #{tpu_custom_call.1} parent=5 // pred_region
        %s156 = ssub.s32 %s13, 1
        %s157 = sand.u32 %s40, 1
        %s158 = scalar_lea.sflag [#allocation3], %s157
        %s159 = sand.u32 %s40, 1
        %s160 = smul.addr %s159, 64
        %s161 = scalar_lea.vmem [#allocation2], %s160
        // Predicated region
        $region25: #{tpu_custom_call.1} parent=23 // pred_check
          %p162 = pneg %p53
        $region26: #{tpu_custom_call.1} parent=23 // pred_check_branch
          %164 = sbr.rel (%p162) target = $region28
        $region27: #{tpu_custom_call.1} parent=23 // pred_region
          %165 = dma.done %s158, 1024
        $region28: #{tpu_custom_call.1} parent=23 // pred_fallthru
          _
        %s166 = sand.u32 %s40, 1
        %s167 = scalar_lea.sflag [#allocation3], %s166
        %s168 = sand.u32 %s40, 1
        %s169 = smul.addr %s168, 64
        %s170 = scalar_lea.vmem [#allocation2], %s169
        %p171 = pneg %p53
        %p172 = pneg %p50
        %p173 = pneg %p81
        %p174 = pneg %p78
        %s175 = sand.u32 %s68, 1
        %s176 = scalar_lea.sflag [#allocation4], %s175
        %s177 = sand.u32 %s68, 1
        %s178 = smul.addr %s177, 64
        %s179 = scalar_lea.vmem [#allocation5], %s178
        %s180 = smul.u32 2, %s22
        %s181 = smul.u32 2, %s23
        %s182 = smul.u32 2, %s22
        %s183 = smul.u32 2, %s23
        %v184 = vld [vmem:[%s161] sm:$0xff]
        %v185 = vld [vmem:[%s161 + $0x8] sm:$0xff]
        %v186 = vld [vmem:[%s161 + $0x10] sm:$0xff]
        %v187 = vld [vmem:[%s161 + $0x18] sm:$0xff]
        %v188 = vld [vmem:[%s161 + $0x20] sm:$0xff]
        %v189 = vld [vmem:[%s161 + $0x28] sm:$0xff]
        %v190 = vld [vmem:[%s161 + $0x30] sm:$0xff]
        %v191 = vld [vmem:[%s161 + $0x38] sm:$0xff]
        %p192 = scmp.lt.s32.totalorder %s23, 1
        // Predicated region
        $region29: #{tpu_custom_call.1} parent=23 // pred_check
          %p193 = pneg %p192
        $region30: #{tpu_custom_call.1} parent=23 // pred_check_branch
          %195 = sbr.rel (%p193) target = $region32
        $region31: #{tpu_custom_call.1} parent=23 // pred_region
          %vm204 = vcmask 1040384
          %v205 = vrot.slane %v184, 7
          %v206 = vrot.slane %v185, 7
          %v207 = vsel %vm204, %v205, %v206
          %v208 = vrot.slane %v186, 7
          %v209 = vrot.slane %v187, 7
          %v210 = vsel %vm204, %v208, %v209
          %v211 = vrot.slane %v188, 7
          %v212 = vrot.slane %v189, 7
          %v213 = vsel %vm204, %v211, %v212
          %v214 = vrot.slane %v190, 7
          %v215 = vrot.slane %v191, 7
          %v216 = vsel %vm204, %v214, %v215
          %v225 = vsel %vm204, 0.0, %v205
          %v226 = vsel %vm204, 0.0, %v208
          %v227 = vsel %vm204, 0.0, %v211
          %v228 = vsel %vm204, 0.0, %v214
          %vm229 = vcmask 130048
          %230 = vst.msk [vmem:[%s179] sm:$0xff] %vm229, %v225
          %231 = vst.msk [vmem:[%s179 + $0x8] sm:$0xff] %vm229, %v207
          %232 = vst.msk [vmem:[%s179 + $0x10] sm:$0xff] %vm229, %v226
          %233 = vst.msk [vmem:[%s179 + $0x18] sm:$0xff] %vm229, %v210
          %234 = vst.msk [vmem:[%s179 + $0x20] sm:$0xff] %vm229, %v227
          %235 = vst.msk [vmem:[%s179 + $0x28] sm:$0xff] %vm229, %v213
          %236 = vst.msk [vmem:[%s179 + $0x30] sm:$0xff] %vm229, %v228
          %237 = vst.msk [vmem:[%s179 + $0x38] sm:$0xff] %vm229, %v216
        $region32: #{tpu_custom_call.1} parent=23 // pred_fallthru
          _
        %p238 = scmp.ge.s32.totalorder %s23, 1
        %p239 = scmp.lt.s32.totalorder %s23, 2
        %p240 = pnand %p238, %p239
        %p241 = pneg %p240
        // Predicated region
        $region33: #{tpu_custom_call.1} parent=23 // pred_check
          _
        $region34: #{tpu_custom_call.1} parent=23 // pred_check_branch
          %243 = sbr.rel (%p240) target = $region36
        $region35: #{tpu_custom_call.1} parent=23 // pred_region
          %252 = vrot.lane.b32.xlu0 %v184, 127
          %v253 = vpop.permute.xlu0 %252
          %254 = vrot.lane.b32.xlu0 %v185, 127
          %v255 = vpop.permute.xlu0 %254
          %256 = vrot.lane.b32.xlu0 %v186, 127
          %v257 = vpop.permute.xlu0 %256
          %258 = vrot.lane.b32.xlu0 %v187, 127
          %v259 = vpop.permute.xlu0 %258
          %260 = vrot.lane.b32.xlu0 %v188, 127
          %v261 = vpop.permute.xlu0 %260
          %262 = vrot.lane.b32.xlu0 %v189, 127
          %v263 = vpop.permute.xlu0 %262
          %264 = vrot.lane.b32.xlu0 %v190, 127
          %v265 = vpop.permute.xlu0 %264
          %266 = vrot.lane.b32.xlu0 %v191, 127
          %v267 = vpop.permute.xlu0 %266
          %vm276 = vcmask 121856
          %v277 = vsel %vm276, %v253, 0.0
          %v278 = vsel %vm276, %v255, 0.0
          %v279 = vsel %vm276, %v257, 0.0
          %v280 = vsel %vm276, %v259, 0.0
          %v281 = vsel %vm276, %v261, 0.0
          %v282 = vsel %vm276, %v263, 0.0
          %v283 = vsel %vm276, %v265, 0.0
          %v284 = vsel %vm276, %v267, 0.0
          %vm285 = vcmask 130048
          %286 = vst.msk [vmem:[%s179] sm:$0xff] %vm285, %v277
          %287 = vst.msk [vmem:[%s179 + $0x8] sm:$0xff] %vm285, %v278
          %288 = vst.msk [vmem:[%s179 + $0x10] sm:$0xff] %vm285, %v279
          %289 = vst.msk [vmem:[%s179 + $0x18] sm:$0xff] %vm285, %v280
          %290 = vst.msk [vmem:[%s179 + $0x20] sm:$0xff] %vm285, %v281
          %291 = vst.msk [vmem:[%s179 + $0x28] sm:$0xff] %vm285, %v282
          %292 = vst.msk [vmem:[%s179 + $0x30] sm:$0xff] %vm285, %v283
          %293 = vst.msk [vmem:[%s179 + $0x38] sm:$0xff] %vm285, %v284
        $region36: #{tpu_custom_call.1} parent=23 // pred_fallthru
          _
        %p294 = scmp.ge.s32.totalorder %s23, 2
        %p295 = scmp.lt.s32.totalorder %s23, 3
        %p296 = pnand %p294, %p295
        %p297 = pneg %p296
        // Predicated region
        $region37: #{tpu_custom_call.1} parent=23 // pred_check
          _
        $region38: #{tpu_custom_call.1} parent=23 // pred_check_branch
          %299 = sbr.rel (%p296) target = $region40
        $region39: #{tpu_custom_call.1} parent=23 // pred_region
          %vm308 = vcmask 1046528
          %v309 = vrot.slane %v184, 1
          %v310 = vrot.slane %v185, 1
          %v311 = vsel %vm308, %v309, %v310
          %v312 = vrot.slane %v186, 1
          %v313 = vrot.slane %v187, 1
          %v314 = vsel %vm308, %v312, %v313
          %v315 = vrot.slane %v188, 1
          %v316 = vrot.slane %v189, 1
          %v317 = vsel %vm308, %v315, %v316
          %v318 = vrot.slane %v190, 1
          %v319 = vrot.slane %v191, 1
          %v320 = vsel %vm308, %v318, %v319
          %v329 = vsel %vm308, %v310, 0.0
          %v330 = vsel %vm308, %v313, 0.0
          %v331 = vsel %vm308, %v316, 0.0
          %v332 = vsel %vm308, %v319, 0.0
          %vm333 = vcmask 130048
          %334 = vst.msk [vmem:[%s179] sm:$0xff] %vm333, %v311
          %335 = vst.msk [vmem:[%s179 + $0x8] sm:$0xff] %vm333, %v329
          %336 = vst.msk [vmem:[%s179 + $0x10] sm:$0xff] %vm333, %v314
          %337 = vst.msk [vmem:[%s179 + $0x18] sm:$0xff] %vm333, %v330
          %338 = vst.msk [vmem:[%s179 + $0x20] sm:$0xff] %vm333, %v317
          %339 = vst.msk [vmem:[%s179 + $0x28] sm:$0xff] %vm333, %v331
          %340 = vst.msk [vmem:[%s179 + $0x30] sm:$0xff] %vm333, %v320
          %341 = vst.msk [vmem:[%s179 + $0x38] sm:$0xff] %vm333, %v332
        $region40: #{tpu_custom_call.1} parent=23 // pred_fallthru
          _
        %p342 = scmp.ge.s32.totalorder %s23, 3
        %p343 = scmp.lt.s32.totalorder %s23, 4
        %p344 = pnand %p342, %p343
        %p345 = pneg %p344
        // Predicated region
        $region41: #{tpu_custom_call.1} parent=23 // pred_check
          _
        $region42: #{tpu_custom_call.1} parent=23 // pred_check_branch
          %347 = sbr.rel (%p344) target = $region44
        $region43: #{tpu_custom_call.1} parent=23 // pred_region
          %356 = vrot.lane.b32.xlu0 %v184, 1
          %v357 = vpop.permute.xlu0 %356
          %358 = vrot.lane.b32.xlu0 %v185, 1
          %v359 = vpop.permute.xlu0 %358
          %360 = vrot.lane.b32.xlu0 %v186, 1
          %v361 = vpop.permute.xlu0 %360
          %362 = vrot.lane.b32.xlu0 %v187, 1
          %v363 = vpop.permute.xlu0 %362
          %364 = vrot.lane.b32.xlu0 %v188, 1
          %v365 = vpop.permute.xlu0 %364
          %366 = vrot.lane.b32.xlu0 %v189, 1
          %v367 = vpop.permute.xlu0 %366
          %368 = vrot.lane.b32.xlu0 %v190, 1
          %v369 = vpop.permute.xlu0 %368
          %370 = vrot.lane.b32.xlu0 %v191, 1
          %v371 = vpop.permute.xlu0 %370
          %vm380 = vcmask 7168
          %v381 = vsel %vm380, 0.0, %v357
          %v382 = vsel %vm380, 0.0, %v359
          %v383 = vsel %vm380, 0.0, %v361
          %v384 = vsel %vm380, 0.0, %v363
          %v385 = vsel %vm380, 0.0, %v365
          %v386 = vsel %vm380, 0.0, %v367
          %v387 = vsel %vm380, 0.0, %v369
          %v388 = vsel %vm380, 0.0, %v371
          %vm389 = vcmask 130048
          %390 = vst.msk [vmem:[%s179] sm:$0xff] %vm389, %v381
          %391 = vst.msk [vmem:[%s179 + $0x8] sm:$0xff] %vm389, %v382
          %392 = vst.msk [vmem:[%s179 + $0x10] sm:$0xff] %vm389, %v383
          %393 = vst.msk [vmem:[%s179 + $0x18] sm:$0xff] %vm389, %v384
          %394 = vst.msk [vmem:[%s179 + $0x20] sm:$0xff] %vm389, %v385
          %395 = vst.msk [vmem:[%s179 + $0x28] sm:$0xff] %vm389, %v386
          %396 = vst.msk [vmem:[%s179 + $0x30] sm:$0xff] %vm389, %v387
          %397 = vst.msk [vmem:[%s179 + $0x38] sm:$0xff] %vm389, %v388
        $region44: #{tpu_custom_call.1} parent=23 // pred_fallthru
          _
        %p398 = scmp.ge.s32.totalorder %s23, 4
        // Predicated region
        $region45: #{tpu_custom_call.1} parent=23 // pred_check
          %p399 = pneg %p398
        $region46: #{tpu_custom_call.1} parent=23 // pred_check_branch
          %401 = sbr.rel (%p399) target = $region48
        $region47: #{tpu_custom_call.1} parent=23 // pred_region
          %vm402 = vcmask 130048
          %403 = vst.msk [vmem:[%s179] sm:$0xff] %vm402, %v184
          %404 = vst.msk [vmem:[%s179 + $0x8] sm:$0xff] %vm402, %v185
          %405 = vst.msk [vmem:[%s179 + $0x10] sm:$0xff] %vm402, %v186
          %406 = vst.msk [vmem:[%s179 + $0x18] sm:$0xff] %vm402, %v187
          %407 = vst.msk [vmem:[%s179 + $0x20] sm:$0xff] %vm402, %v188
          %408 = vst.msk [vmem:[%s179 + $0x28] sm:$0xff] %vm402, %v189
          %409 = vst.msk [vmem:[%s179 + $0x30] sm:$0xff] %vm402, %v190
          %410 = vst.msk [vmem:[%s179 + $0x38] sm:$0xff] %vm402, %v191
        $region48: #{tpu_custom_call.1} parent=23 // pred_fallthru
          _
        %s411 = sand.u32 %s68, 1
        %s412 = scalar_lea.sflag [#allocation4], %s411
        %s413 = sand.u32 %s68, 1
        %s414 = smul.addr %s413, 64
        %s415 = scalar_lea.vmem [#allocation5], %s414
        // Predicated region
        $region49: #{tpu_custom_call.1} parent=23 // pred_check
          %p416 = pneg %p78
        $region50: #{tpu_custom_call.1} parent=23 // pred_check_branch
          %418 = sbr.rel (%p416) target = $region52
        $region51: #{tpu_custom_call.1} parent=23 // pred_region
          #allocation9 [shape = 'u32[6]{0}', space=smem, size = 0x18, scoped, tag = 'DMA stride descriptor']
          %s419 = smul.u32 2, %s22
          %s420 = smul.u32 2, %s23
          %s422 = ssub.s32 1024, 1024
          %423 = vsyncadd %s412, %s422
          %s424 = smul.addr %s420, 2
          %s425 = smul.addr %s419, 24
          %s426 = sadd.s32 %s424, %s425
          %s427 = smul.addr %s426, 128
          %s428 = scalar_lea.hbm %s1, %s427
          %s430 = sshll.u32 1, 14
          %s431 = sxor.u32 4294967295, %s430
          %s434 = sshll.u32 7, 18
          %s435 = sxor.u32 4294967295, %s434
          %s436 = sand.u32 0, %s435
          %s438 = sor.u32 %s436, 0
          %s439 = sshll.u32 %s415, 4
          %s440 = int_to_ptr.vmem [resolvable:$true] %s439
          %446 = sst [smem:[#allocation9]] 512
          %s447 = scalar_lea.smem [#allocation9], 1
          %448 = sst [smem:[%s447]] 3072
          %s449 = scalar_lea.smem [#allocation9], 2
          %450 = sst [smem:[%s449]] 4
          %s451 = scalar_lea.smem [#allocation9], 3
          %452 = sst [smem:[%s451]] 128
          %s453 = scalar_lea.smem [#allocation9], 4
          %454 = sst [smem:[%s453]] 128
          %s455 = scalar_lea.smem [#allocation9], 5
          %456 = sst [smem:[%s455]] 8
          %458 = dma.general %s440, 1024, %s428, %s412, 131072, [#allocation9], %s438, 0
        $region52: #{tpu_custom_call.1} parent=23 // pred_fallthru
          _
      $region24: #{tpu_custom_call.1} parent=5 // pred_fallthru
        _
      %p459 = scmp.le.s32.totalorder 2, %s13
      // Predicated region
      $region53: #{tpu_custom_call.1} parent=5 // pred_check
        %p460 = pneg %p459
      $region54: #{tpu_custom_call.1} parent=5 // pred_check_branch
        %462 = sbr.rel (%p460) target = $region56
      $region55: #{tpu_custom_call.1} parent=5 // pred_region
        %s463 = ssub.s32 %s13, 2
        // Predicated region
        $region57: #{tpu_custom_call.1} parent=55 // pred_check
          %p464 = pneg %p84
        $region58: #{tpu_custom_call.1} parent=55 // pred_check_branch
          %466 = sbr.rel (%p464) target = $region60
        $region59: #{tpu_custom_call.1} parent=55 // pred_region
          %s467 = sand.u32 %s69, 1
          %s468 = scalar_lea.sflag [#allocation4], %s467
          %s469 = sand.u32 %s69, 1
          %s470 = smul.addr %s469, 64
          %s471 = scalar_lea.vmem [#allocation5], %s470
          %472 = dma.done %s468, 1024
        $region60: #{tpu_custom_call.1} parent=55 // pred_fallthru
          _
      $region56: #{tpu_custom_call.1} parent=5 // pred_fallthru
        _
    $region6: #{tpu_custom_call.1} parent=1 // loop_footer
      %s17 = sadd.s32 1, %s13
    $region7: #{tpu_custom_call.1} parent=1 // loop_footer_branch
      %12 = sbr.rel target = $region3
    $region8: #{tpu_custom_call.1} parent=1 // loop_exit
      _
    %473 = vsyncpa [#allocation3], 1
    %s474 = scalar_lea.sflag [#allocation3], 1
    %475 = vsyncpa %s474, 1
    %476 = vsyncpa [#allocation4], 1
    %s477 = scalar_lea.sflag [#allocation4], 1
    %478 = vsyncpa %s477, 1

</llo_original>
